<compile_context>
chip_gen: v6e
topology: v6e:2x2x1
jax: 0.10.0
libtpu: 0.0.40
codegen_flags: <defaults>
</compile_context>

<pallas_src>
import functools
import math

import jax
import jax.numpy as jnp
from jax.experimental import pallas as pl
from jax.experimental.pallas import tpu as pltpu

LANE = 128
SUBLANE = 8


def _round_up(n, m):
    return ((n + m - 1) // m) * m


# ---------------------------------------------------------------------------
# Fused kernel: (Linear -> swish)* + fused [output Linear + skip Linear]
# ---------------------------------------------------------------------------
def _mlp_fused_kernel(*refs, num_hidden: int):
    # refs layout:
    #   [0]                 x tile                      (TM, Din_p)   f32
    #   [1 .. 1+2H)         hidden (W bf16, b f32) pairs
    #   [1+2H], [2+2H]      fused final W / b           (Dh_p+Din_p, Dout_p) bf16 / (1, Dout_p) f32
    #   [3+2H]              output tile                 (TM, Dout_p)  f32
    x_ref = refs[0]
    hidden_refs = refs[1 : 1 + 2 * num_hidden]
    w_fin_ref = refs[1 + 2 * num_hidden]
    b_fin_ref = refs[2 + 2 * num_hidden]
    o_ref = refs[3 + 2 * num_hidden]

    # bf16 operands for the MXU; f32 accumulation + f32 elementwise math.
    x_bf = x_ref[...].astype(jnp.bfloat16)

    # for layer in layers[:-2]: data = swish(layer(data))
    h_bf = x_bf
    for li in range(num_hidden):
        w = hidden_refs[2 * li][...]           # bf16
        b = hidden_refs[2 * li + 1][...]       # f32
        y = jnp.dot(h_bf, w, preferred_element_type=jnp.float32) + b
        # swish(y) = y*sigmoid(y) = 0.5*y*(1 + tanh(0.5*y)): one EUP op/elem.
        a = 0.5 * y * (1.0 + jnp.tanh(0.5 * y))
        h_bf = a.astype(jnp.bfloat16)

    # data = layers[-2](data) + layers[-1](x), fused as a single 2x-K matmul:
    #   [h, x] @ [W_out ; W_skip] + (b_out + b_skip)
    xh = jnp.concatenate([h_bf, x_bf], axis=-1)
    out = jnp.dot(xh, w_fin_ref[...], preferred_element_type=jnp.float32)
    out = out + b_fin_ref[...]
    o_ref[...] = out.astype(o_ref.dtype)


# ---------------------------------------------------------------------------
# One-time parameter preparation: pad to lane-dense shapes, cast weights bf16,
# stack the output & skip weights along K, merge their biases.
# ---------------------------------------------------------------------------
def prepare_params(params):
    w_skip, b_skip = params["skip"]
    w_out, b_out = params["out"]
    hidden = params["hidden"]

    d_in = w_skip.shape[0]
    d_out = w_skip.shape[1]
    d_in_p = _round_up(d_in, LANE)
    d_out_p = _round_up(d_out, LANE)

    def pad_mat(w, rows, cols):
        return jnp.pad(w, ((0, rows - w.shape[0]), (0, cols - w.shape[1])))

    def pad_bias(b, cols):
        return jnp.pad(b, (0, cols - b.shape[0])).reshape(1, cols)

    hid_prepared = []
    prev_p = d_in_p
    for (w, b) in hidden:
        cur_p = _round_up(w.shape[1], LANE)
        hid_prepared.append((
            pad_mat(w, prev_p, cur_p).astype(jnp.bfloat16),
            pad_bias(b, cur_p).astype(jnp.float32),
        ))
        prev_p = cur_p

    # Fused final projection: rows [0:prev_p) multiply h, rows [prev_p:) multiply x.
    w_fin = jnp.concatenate(
        [pad_mat(w_out, prev_p, d_out_p), pad_mat(w_skip, d_in_p, d_out_p)], axis=0
    ).astype(jnp.bfloat16)
    b_fin = pad_bias(b_out + b_skip, d_out_p).astype(jnp.float32)

    return {"hidden": hid_prepared, "final_w": w_fin, "final_b": b_fin}


# ---------------------------------------------------------------------------
# Wrapper: pad x, build BlockSpecs, single pallas_call
# ---------------------------------------------------------------------------
def mlp_forward(x, prepared, *, output_dim, block_rows=512):
    """Fused MLP forward.  x: [B, input_dim] -> [B, output_dim]."""
    B, d_in = x.shape
    dtype = x.dtype
    num_hidden = len(prepared["hidden"])

    d_in_p = _round_up(d_in, LANE)
    d_out_p = prepared["final_w"].shape[1]

    tm = block_rows if B >= block_rows else _round_up(B, SUBLANE)
    b_p = _round_up(B, tm)
    x_p = jnp.pad(x, ((0, b_p - B), (0, d_in_p - d_in)))

    def resident_spec(shape):
        # Constant index_map -> block never changes -> single-buffer it.
        return pl.BlockSpec(shape, lambda i: (0, 0), pipeline_mode=pl.Buffered(1))

    operands = [x_p]
    in_specs = [pl.BlockSpec((tm, d_in_p), lambda i: (i, 0))]   # double-buffered
    for (w, b) in prepared["hidden"]:
        operands += [w, b]
        in_specs += [resident_spec(w.shape), resident_spec(b.shape)]
    operands += [prepared["final_w"], prepared["final_b"]]
    in_specs += [resident_spec(prepared["final_w"].shape),
                 resident_spec(prepared["final_b"].shape)]

    # TODO(synk): if padded weight residency approaches ~half the per-TC VMEM
    # limit (esp. v7x: 64 MiB/TC, weights duplicated per TC under "parallel"),
    # add a K/N-reduction grid axis ("arbitrary", last) with an f32 VMEM
    # accumulator instead of keeping full [K, N] weights resident.

    # Explicit VMEM budget: resident weights (single-buffered) + double-buffered
    # x/out tiles + generous f32 intermediate headroom, capped at v7x per-TC.
    weight_bytes = sum(int(a.size) * a.dtype.itemsize for a in operands[1:])
    io_bytes = 2 * tm * (d_in_p + d_out_p) * 4
    widths = [d_in_p, d_out_p, prepared["final_w"].shape[0]]
    widths += [w.shape[1] for (w, _) in prepared["hidden"]]
    act_bytes = 4 * tm * max(widths) * 4
    vmem_limit = int(min(max(weight_bytes + io_bytes + act_bytes + (8 << 20),
                             32 << 20), 64 << 20))

    out_padded = pl.pallas_call(
        functools.partial(_mlp_fused_kernel, num_hidden=num_hidden),
        out_shape=jax.ShapeDtypeStruct((b_p, d_out_p), dtype),
        grid=(b_p // tm,),
        in_specs=in_specs,
        out_specs=pl.BlockSpec((tm, d_out_p), lambda i: (i, 0)),
        compiler_params=pltpu.CompilerParams(
            dimension_semantics=("parallel",),
            vmem_limit_bytes=vmem_limit),
    )(*operands)

    return out_padded[:B, :output_dim]


# ---------------------------------------------------------------------------
# Parameter init (deterministic, mimics PyTorch nn.Linear default uniform init)
# ---------------------------------------------------------------------------
def _init_linear(key, fan_in, fan_out, dtype=jnp.float32):
    kw, kb = jax.random.split(key)
    bound = 1.0 / math.sqrt(fan_in)
    # Stored as [in, out] (already transposed for x @ W).
    w = jax.random.uniform(kw, (fan_in, fan_out), dtype, minval=-bound, maxval=bound)
    b = jax.random.uniform(kb, (fan_out,), dtype, minval=-bound, maxval=bound)
    return w, b


def init_mlp_params(key, input_dim, output_dim, nunits):
    keys = jax.random.split(key, len(nunits) + 2)
    hidden = []
    in_dim = input_dim
    for i, nunit in enumerate(nunits):
        hidden.append(_init_linear(keys[i], in_dim, nunit))
        in_dim = nunit
    out_layer = _init_linear(keys[len(nunits)], in_dim, output_dim)          # layers[-2]
    skip_layer = _init_linear(keys[len(nunits) + 1], input_dim, output_dim)  # layers[-1]
    return {"hidden": hidden, "out": out_layer, "skip": skip_layer}


# ---------------------------------------------------------------------------
if __name__ == "__main__":
    key = jax.random.PRNGKey(0)
    k_params, k_x = jax.random.split(key)

    batch = 8
    input_dim = 32
    nunits = (32, 64)
    output_dim = 16

    params = init_mlp_params(k_params, input_dim, output_dim, nunits)
    prepared = prepare_params(params)   # one-time padding / bf16 / stacking
    x = jax.random.normal(k_x, (batch, input_dim), dtype=jnp.float32)

    fwd = jax.jit(mlp_forward, static_argnames=("output_dim", "block_rows"))
    out = fwd(x, prepared, output_dim=output_dim)
    jax.block_until_ready(out)

    # sanity check against plain-JAX f32 reference (kernel uses bf16 MXU
    # operands with f32 accumulation, so allow a modest tolerance)
    def ref_forward(x, params):
        w_skip, b_skip = params["skip"]
        data_l = x @ w_skip + b_skip
        data = x
        for w, b in params["hidden"]:
            h = data @ w + b
            data = h * jax.nn.sigmoid(h)
        w_out, b_out = params["out"]
        return data @ w_out + b_out + data_l

    ref = ref_forward(x, params)
    assert out.shape == (batch, output_dim)
    assert jnp.allclose(out, ref, atol=2e-2, rtol=2e-2), float(
        jnp.max(jnp.abs(out - ref)))

    print("KERNEL_OK")
</pallas_src>

<mosaic_0001>
module attributes {stable_mosaic.version = 11 : i64} {
  func.func @_mlp_fused_kernel(%arg0: i32, %arg1: memref<8x128xf32, #tpu.memory_space<vmem>>, %arg2: memref<128x128xbf16, #tpu.memory_space<vmem>>, %arg3: memref<1x128xf32, #tpu.memory_space<vmem>>, %arg4: memref<128x128xbf16, #tpu.memory_space<vmem>>, %arg5: memref<1x128xf32, #tpu.memory_space<vmem>>, %arg6: memref<256x128xbf16, #tpu.memory_space<vmem>>, %arg7: memref<1x128xf32, #tpu.memory_space<vmem>>, %arg8: memref<8x128xf32, #tpu.memory_space<vmem>>) attributes {dimension_semantics = [#tpu.dimension_semantics<parallel>], iteration_bounds = array<i64: 1>, scalar_prefetch = 0 : i64, scratch_operands = 0 : i64, tpu.core_type = #tpu.core_type<tc>, window_params = [{transform_indices = @transform_0, window_bounds = array<i64: 8, 128>}, {pipeline_mode = #tpu.pipeline_mode<synchronous>, transform_indices = @transform_1, window_bounds = array<i64: 128, 128>}, {pipeline_mode = #tpu.pipeline_mode<synchronous>, transform_indices = @transform_2, window_bounds = array<i64: 1, 128>}, {pipeline_mode = #tpu.pipeline_mode<synchronous>, transform_indices = @transform_3, window_bounds = array<i64: 128, 128>}, {pipeline_mode = #tpu.pipeline_mode<synchronous>, transform_indices = @transform_4, window_bounds = array<i64: 1, 128>}, {pipeline_mode = #tpu.pipeline_mode<synchronous>, transform_indices = @transform_5, window_bounds = array<i64: 256, 128>}, {pipeline_mode = #tpu.pipeline_mode<synchronous>, transform_indices = @transform_6, window_bounds = array<i64: 1, 128>}, {transform_indices = @transform_7, window_bounds = array<i64: 8, 128>}]} {
    %c0 = arith.constant 0 : index
    %c0_0 = arith.constant 0 : index
    %0 = vector.load %arg1[%c0, %c0_0] : memref<8x128xf32, #tpu.memory_space<vmem>>, vector<8x128xf32>
    %1 = arith.truncf %0 : vector<8x128xf32> to vector<8x128xbf16>
    %c0_1 = arith.constant 0 : index
    %c0_2 = arith.constant 0 : index
    %2 = vector.load %arg2[%c0_1, %c0_2] : memref<128x128xbf16, #tpu.memory_space<vmem>>, vector<128x128xbf16>
    %c0_3 = arith.constant 0 : index
    %c0_4 = arith.constant 0 : index
    %3 = vector.load %arg3[%c0_3, %c0_4] : memref<1x128xf32, #tpu.memory_space<vmem>>, vector<1x128xf32>
    %cst = arith.constant dense<0.000000e+00> : vector<8x128xf32>
    %4 = tpu.matmul %1, %2, %cst {dimension_numbers = #tpu.dot_dimension_numbers<[1], [0], [0], [1], [0, 0, 1, 1], [], []>} : vector<8x128xbf16>, vector<128x128xbf16>, vector<8x128xf32> -> vector<8x128xf32>
    %5 = vector.broadcast %3 : vector<1x128xf32> to vector<8x128xf32>
    %6 = arith.addf %4, %5 : vector<8x128xf32>
    %cst_5 = arith.constant 5.000000e-01 : f32
    %7 = vector.broadcast %cst_5 : f32 to vector<8x128xf32>
    %8 = arith.mulf %7, %6 : vector<8x128xf32>
    %cst_6 = arith.constant 5.000000e-01 : f32
    %9 = vector.broadcast %cst_6 : f32 to vector<8x128xf32>
    %10 = arith.mulf %9, %6 : vector<8x128xf32>
    %11 = math.tanh %10 : vector<8x128xf32>
    %cst_7 = arith.constant 1.000000e+00 : f32
    %12 = vector.broadcast %cst_7 : f32 to vector<8x128xf32>
    %13 = arith.addf %12, %11 : vector<8x128xf32>
    %14 = arith.mulf %8, %13 : vector<8x128xf32>
    %15 = arith.truncf %14 : vector<8x128xf32> to vector<8x128xbf16>
    %c0_8 = arith.constant 0 : index
    %c0_9 = arith.constant 0 : index
    %16 = vector.load %arg4[%c0_8, %c0_9] : memref<128x128xbf16, #tpu.memory_space<vmem>>, vector<128x128xbf16>
    %c0_10 = arith.constant 0 : index
    %c0_11 = arith.constant 0 : index
    %17 = vector.load %arg5[%c0_10, %c0_11] : memref<1x128xf32, #tpu.memory_space<vmem>>, vector<1x128xf32>
    %cst_12 = arith.constant dense<0.000000e+00> : vector<8x128xf32>
    %18 = tpu.matmul %15, %16, %cst_12 {dimension_numbers = #tpu.dot_dimension_numbers<[1], [0], [0], [1], [0, 0, 1, 1], [], []>} : vector<8x128xbf16>, vector<128x128xbf16>, vector<8x128xf32> -> vector<8x128xf32>
    %19 = vector.broadcast %17 : vector<1x128xf32> to vector<8x128xf32>
    %20 = arith.addf %18, %19 : vector<8x128xf32>
    %cst_13 = arith.constant 5.000000e-01 : f32
    %21 = vector.broadcast %cst_13 : f32 to vector<8x128xf32>
    %22 = arith.mulf %21, %20 : vector<8x128xf32>
    %cst_14 = arith.constant 5.000000e-01 : f32
    %23 = vector.broadcast %cst_14 : f32 to vector<8x128xf32>
    %24 = arith.mulf %23, %20 : vector<8x128xf32>
    %25 = math.tanh %24 : vector<8x128xf32>
    %cst_15 = arith.constant 1.000000e+00 : f32
    %26 = vector.broadcast %cst_15 : f32 to vector<8x128xf32>
    %27 = arith.addf %26, %25 : vector<8x128xf32>
    %28 = arith.mulf %22, %27 : vector<8x128xf32>
    %29 = arith.truncf %28 : vector<8x128xf32> to vector<8x128xbf16>
    %30 = tpu.concatenate %29, %1 in 1 : vector<8x128xbf16>, vector<8x128xbf16> -> vector<8x256xbf16>
    %c0_16 = arith.constant 0 : index
    %c0_17 = arith.constant 0 : index
    %31 = vector.load %arg6[%c0_16, %c0_17] : memref<256x128xbf16, #tpu.memory_space<vmem>>, vector<256x128xbf16>
    %cst_18 = arith.constant dense<0.000000e+00> : vector<8x128xf32>
    %32 = tpu.matmul %30, %31, %cst_18 {dimension_numbers = #tpu.dot_dimension_numbers<[1], [0], [0], [1], [0, 0, 1, 1], [], []>} : vector<8x256xbf16>, vector<256x128xbf16>, vector<8x128xf32> -> vector<8x128xf32>
    %c0_19 = arith.constant 0 : index
    %c0_20 = arith.constant 0 : index
    %33 = vector.load %arg7[%c0_19, %c0_20] : memref<1x128xf32, #tpu.memory_space<vmem>>, vector<1x128xf32>
    %34 = vector.broadcast %33 : vector<1x128xf32> to vector<8x128xf32>
    %35 = arith.addf %32, %34 : vector<8x128xf32>
    %c0_21 = arith.constant 0 : index
    %c0_22 = arith.constant 0 : index
    %36 = vector.load %arg8[%c0_21, %c0_22] : memref<8x128xf32, #tpu.memory_space<vmem>>, vector<8x128xf32>
    tpu.vector_store %arg8[%c0_21, %c0_22], %35 {strides = array<i32>} : memref<8x128xf32, #tpu.memory_space<vmem>>, vector<8x128xf32>,
    return
  }
  func.func @transform_0(%arg0: i32) -> (i32, i32) {
    %c0_i32 = arith.constant 0 : i32
    %c0_i32_0 = arith.constant 0 : i32
    return %arg0, %c0_i32 : i32, i32
  }
  func.func @transform_1(%arg0: i32) -> (i32, i32) {
    %c0_i32 = arith.constant 0 : i32
    %c0_i32_0 = arith.constant 0 : i32
    %c0_i32_1 = arith.constant 0 : i32
    return %c0_i32, %c0_i32_0 : i32, i32
  }
  func.func @transform_2(%arg0: i32) -> (i32, i32) {
    %c0_i32 = arith.constant 0 : i32
    %c0_i32_0 = arith.constant 0 : i32
    %c0_i32_1 = arith.constant 0 : i32
    return %c0_i32, %c0_i32_0 : i32, i32
  }
  func.func @transform_3(%arg0: i32) -> (i32, i32) {
    %c0_i32 = arith.constant 0 : i32
    %c0_i32_0 = arith.constant 0 : i32
    %c0_i32_1 = arith.constant 0 : i32
    return %c0_i32, %c0_i32_0 : i32, i32
  }
  func.func @transform_4(%arg0: i32) -> (i32, i32) {
    %c0_i32 = arith.constant 0 : i32
    %c0_i32_0 = arith.constant 0 : i32
    %c0_i32_1 = arith.constant 0 : i32
    return %c0_i32, %c0_i32_0 : i32, i32
  }
  func.func @transform_5(%arg0: i32) -> (i32, i32) {
    %c0_i32 = arith.constant 0 : i32
    %c0_i32_0 = arith.constant 0 : i32
    %c0_i32_1 = arith.constant 0 : i32
    return %c0_i32, %c0_i32_0 : i32, i32
  }
  func.func @transform_6(%arg0: i32) -> (i32, i32) {
    %c0_i32 = arith.constant 0 : i32
    %c0_i32_0 = arith.constant 0 : i32
    %c0_i32_1 = arith.constant 0 : i32
    return %c0_i32, %c0_i32_0 : i32, i32
  }
  func.func @transform_7(%arg0: i32) -> (i32, i32) {
    %c0_i32 = arith.constant 0 : i32
    %c0_i32_0 = arith.constant 0 : i32
    return %arg0, %c0_i32 : i32, i32
  }
}

</mosaic_0001>

<llo_original>
// kernel: mlp_forward.1
$region0: #{mlp_forward.1}
  #allocation0 [shape = 'u32[]', space=smem, size = 0x4, offset = 0x4, fixed_abs, tag = 'smem constant byte address 0x4 - core index']
  #allocation1 [shape = 'u32[144,128]{1,0:T(1,128)}', space=vmem, size = 0x12000, scoped, tag = 'internal scratch']
  %s0 = inlined_call_operand.vmem [shape: f32[8,128], index: 0, kind: input, shape index: {}]
  %s1 = inlined_call_operand.hbm [shape: bf16[128,128], index: 1, kind: input, shape index: {}]
  %s2 = inlined_call_operand.vmem [shape: f32[1,128], index: 2, kind: input, shape index: {}]
  %s3 = inlined_call_operand.hbm [shape: bf16[128,128], index: 3, kind: input, shape index: {}]
  %s4 = inlined_call_operand.vmem [shape: f32[1,128], index: 4, kind: input, shape index: {}]
  %s5 = inlined_call_operand.hbm [shape: bf16[256,128], index: 5, kind: input, shape index: {}]
  %s6 = inlined_call_operand.vmem [shape: f32[1,128], index: 6, kind: input, shape index: {}]
  %s7 = inlined_call_operand.hbm [shape: f32[8,128], index: 7, kind: output, shape index: {}]
  %s8 = sld [smem:[#allocation0]]
  $region50: #{mlp_forward.1} parent=0
    _
  %s10 = ssub.s32 1, %s8
  %s11 = scalar_select 0, %s10, %s8
  $region1: #{mlp_forward.1} parent=0
    #allocation2 [shape = 'u8[32768]{0}', space=vmem, size = 0x8000, scoped, tag = 'input window, operand 1, single buffered']
    #allocation3 [shape = 's32[1]{0}', space=sflag, size = 0x4, scoped, tag = 'scoped memory for mlp_forward.1']
    #allocation4 [shape = 's32[1]{0}', space=sflag, size = 0x4, scoped, tag = 'scoped memory for mlp_forward.1']
    #allocation5 [shape = 'u8[32768]{0}', space=vmem, size = 0x8000, scoped, tag = 'input window, operand 3, single buffered']
    #allocation6 [shape = 's32[1]{0}', space=sflag, size = 0x4, scoped, tag = 'scoped memory for mlp_forward.1']
    #allocation7 [shape = 'u8[65536]{0}', space=vmem, size = 0x10000, scoped, tag = 'input window, operand 5, single buffered']
    #allocation8 [shape = 'u8[4096]{0}', space=vmem, size = 0x1000, scoped, tag = 'output window, operand 0, single buffered']
    %12 = vsyncpa [#allocation3], 0
    %13 = vsyncpa [#allocation6], 0
    %14 = vsyncpa [#allocation4], 0
    // Predicated region
    $region2: #{mlp_forward.1} parent=1 // pred_check
      _
    $region3: #{mlp_forward.1} parent=1 // pred_check_branch
      %16 = sbr.rel (0) target = $region5
    $region4: #{mlp_forward.1} parent=1 // pred_region
      _
    $region5: #{mlp_forward.1} parent=1 // pred_fallthru
      _
    // Predicated region
    $region6: #{mlp_forward.1} parent=1 // pred_check
      _
    $region7: #{mlp_forward.1} parent=1 // pred_check_branch
      %18 = sbr.rel (0) target = $region9
    $region8: #{mlp_forward.1} parent=1 // pred_region
      %s20 = ssub.s32 1024, 1024
      %21 = vsyncadd [#allocation3], %s20
      %s22 = sshll.u32 [#allocation2], 4
      %s23 = int_to_ptr.vmem [resolvable:$true] %s22
      %28 = dma.hbm_to_vmem [thread:$0]  %s1, 1024, %s23, [#allocation3], 64, 64, 4
    $region9: #{mlp_forward.1} parent=1 // pred_fallthru
      _
    // Predicated region
    $region10: #{mlp_forward.1} parent=1 // pred_check
      _
    $region11: #{mlp_forward.1} parent=1 // pred_check_branch
      %30 = sbr.rel (0) target = $region13
    $region12: #{mlp_forward.1} parent=1 // pred_region
      _
    $region13: #{mlp_forward.1} parent=1 // pred_fallthru
      _
    // Predicated region
    $region14: #{mlp_forward.1} parent=1 // pred_check
      _
    $region15: #{mlp_forward.1} parent=1 // pred_check_branch
      %32 = sbr.rel (0) target = $region17
    $region16: #{mlp_forward.1} parent=1 // pred_region
      %s34 = ssub.s32 1024, 1024
      %35 = vsyncadd [#allocation6], %s34
      %s36 = sshll.u32 [#allocation5], 4
      %s37 = int_to_ptr.vmem [resolvable:$true] %s36
      %42 = dma.hbm_to_vmem [thread:$0]  %s3, 1024, %s37, [#allocation6], 64, 64, 4
    $region17: #{mlp_forward.1} parent=1 // pred_fallthru
      _
    // Predicated region
    $region18: #{mlp_forward.1} parent=1 // pred_check
      _
    $region19: #{mlp_forward.1} parent=1 // pred_check_branch
      %44 = sbr.rel (0) target = $region21
    $region20: #{mlp_forward.1} parent=1 // pred_region
      _
    $region21: #{mlp_forward.1} parent=1 // pred_fallthru
      _
    // Predicated region
    $region22: #{mlp_forward.1} parent=1 // pred_check
      _
    $region23: #{mlp_forward.1} parent=1 // pred_check_branch
      %46 = sbr.rel (0) target = $region25
    $region24: #{mlp_forward.1} parent=1 // pred_region
      %s48 = ssub.s32 2048, 2048
      %49 = vsyncadd [#allocation6], %s48
      %s50 = sshll.u32 [#allocation7], 4
      %s51 = int_to_ptr.vmem [resolvable:$true] %s50
      %56 = dma.hbm_to_vmem [thread:$0]  %s5, 2048, %s51, [#allocation6], 64, 64, 4
    $region25: #{mlp_forward.1} parent=1 // pred_fallthru
      _
    // Predicated region
    $region26: #{mlp_forward.1} parent=1 // pred_check
      _
    $region27: #{mlp_forward.1} parent=1 // pred_check_branch
      %58 = sbr.rel (0) target = $region29
    $region28: #{mlp_forward.1} parent=1 // pred_region
      _
    $region29: #{mlp_forward.1} parent=1 // pred_fallthru
      _
    // Predicated region
    $region30: #{mlp_forward.1} parent=1 // pred_check
      _
    $region31: #{mlp_forward.1} parent=1 // pred_check_branch
      %60 = sbr.rel (0) target = $region33
    $region32: #{mlp_forward.1} parent=1 // pred_region
      %61 = dma.done [#allocation3], 1024
    $region33: #{mlp_forward.1} parent=1 // pred_fallthru
      _
    // Predicated region
    $region34: #{mlp_forward.1} parent=1 // pred_check
      _
    $region35: #{mlp_forward.1} parent=1 // pred_check_branch
      %63 = sbr.rel (0) target = $region37
    $region36: #{mlp_forward.1} parent=1 // pred_region
      %64 = dma.done [#allocation6], 1024
    $region37: #{mlp_forward.1} parent=1 // pred_fallthru
      _
    // Predicated region
    $region38: #{mlp_forward.1} parent=1 // pred_check
      _
    $region39: #{mlp_forward.1} parent=1 // pred_check_branch
      %66 = sbr.rel (0) target = $region41
    $region40: #{mlp_forward.1} parent=1 // pred_region
      %67 = dma.done [#allocation6], 2048
    $region41: #{mlp_forward.1} parent=1 // pred_fallthru
      _
    %v69 = vld [vmem:[%s0] sm:$0xff]
    %v70 = vpack.c.bf16 %v69, %v69
    %v71 = vld [vmem:[#allocation2] sm:$0xf]
    %v72 = vld [vmem:[#allocation2 + $0x4] sm:$0xf]
    %v73 = vld [vmem:[#allocation2 + $0x8] sm:$0xf]
    %v74 = vld [vmem:[#allocation2 + $0xc] sm:$0xf]
    %v75 = vld [vmem:[#allocation2 + $0x10] sm:$0xf]
    %v76 = vld [vmem:[#allocation2 + $0x14] sm:$0xf]
    %v77 = vld [vmem:[#allocation2 + $0x18] sm:$0xf]
    %v78 = vld [vmem:[#allocation2 + $0x1c] sm:$0xf]
    %v79 = vld [vmem:[#allocation2 + $0x20] sm:$0xf]
    %v80 = vld [vmem:[#allocation2 + $0x24] sm:$0xf]
    %v81 = vld [vmem:[#allocation2 + $0x28] sm:$0xf]
    %v82 = vld [vmem:[#allocation2 + $0x2c] sm:$0xf]
    %v83 = vld [vmem:[#allocation2 + $0x30] sm:$0xf]
    %v84 = vld [vmem:[#allocation2 + $0x34] sm:$0xf]
    %v85 = vld [vmem:[#allocation2 + $0x38] sm:$0xf]
    %v86 = vld [vmem:[#allocation2 + $0x3c] sm:$0xf]
    %v87 = vld [vmem:[%s2] sm:$0x1]
    %v89 = vlaneseq
    %v90 = vshrl.u32 %v89, 7
    %v91 = vsub.s32 0, %v90
    %v92 = vrot.slane %v87, %v91
    %v110 = vunpack.c.l.b16 %v71
    %v111 = vunpack.c.l.b16 %v72
    %v112 = vunpack.c.l.b16 %v73
    %v113 = vunpack.c.l.b16 %v74
    %v114 = vunpack.c.l.b16 %v75
    %v115 = vunpack.c.l.b16 %v76
    %v116 = vunpack.c.l.b16 %v77
    %v117 = vunpack.c.l.b16 %v78
    %v118 = vunpack.c.l.b16 %v79
    %v119 = vunpack.c.l.b16 %v80
    %v120 = vunpack.c.l.b16 %v81
    %v121 = vunpack.c.l.b16 %v82
    %v122 = vunpack.c.l.b16 %v83
    %v123 = vunpack.c.l.b16 %v84
    %v124 = vunpack.c.l.b16 %v85
    %v125 = vunpack.c.l.b16 %v86
    %v126 = vpack.c.b16 %v111, %v110
    %v127 = vpack.c.b16 %v113, %v112
    %v128 = vpack.c.b16 %v115, %v114
    %v129 = vpack.c.b16 %v117, %v116
    %v130 = vpack.c.b16 %v119, %v118
    %v131 = vpack.c.b16 %v121, %v120
    %v132 = vpack.c.b16 %v123, %v122
    %v133 = vpack.c.b16 %v125, %v124
    %142 = vmatprep.subr.bf16.mxu0 0
    %143 = vmatpush1.bf16.msra.mxu0 %v133
    %144 = vmatprep.subr.bf16.mxu0 0
    %145 = vmatpush1.bf16.msra.mxu0 %v132
    %146 = vmatprep.subr.bf16.mxu0 0
    %147 = vmatpush1.bf16.msra.mxu0 %v131
    %148 = vmatprep.subr.bf16.mxu0 0
    %149 = vmatpush1.bf16.msra.mxu0 %v130
    %150 = vmatprep.subr.bf16.mxu0 0
    %151 = vmatpush1.bf16.msra.mxu0 %v129
    %152 = vmatprep.subr.bf16.mxu0 0
    %153 = vmatpush1.bf16.msra.mxu0 %v128
    %154 = vmatprep.subr.bf16.mxu0 0
    %155 = vmatpush1.bf16.msra.mxu0 %v127
    %156 = vmatprep.subr.bf16.mxu0 0
    %157 = vmatpush1.bf16.msra.mxu0 %v126
    %158 = vmatprep.subr.bf16.mxu0 0
    %159 = vmatpush2.bf16.msra.mxu0 0
    %160 = vmatprep.subr.bf16.mxu0 0
    %161 = vmatpush2.bf16.msra.mxu0 0
    %162 = vmatprep.subr.bf16.mxu0 0
    %163 = vmatpush2.bf16.msra.mxu0 0
    %164 = vmatprep.subr.bf16.mxu0 0
    %165 = vmatpush2.bf16.msra.mxu0 0
    %166 = vmatprep.subr.bf16.mxu0 0
    %167 = vmatpush2.bf16.msra.mxu0 0
    %168 = vmatprep.subr.bf16.mxu0 0
    %169 = vmatpush2.bf16.msra.mxu0 0
    %170 = vmatprep.subr.bf16.mxu0 0
    %171 = vmatpush2.bf16.msra.mxu0 0
    %172 = vmatprep.subr.bf16.mxu0 0
    %173 = vmatpush2.bf16.msra.mxu0 0
    %174 = vmatprep.mubr.bf16.mxu0 0
    %175 = vmatmul.mubr.bf16.gmra.mxu0 %v70
    %v176 = vpop.f32.mrf.mxu0
    %v177 = vadd.f32 %v92, %v176
    %v178 = vpop.f32.mrf.mxu0
    %v179 = vpop.f32.mrf.mxu0
    %v180 = vpop.f32.mrf.mxu0
    %181 = vdwg.mxu0
    %v182 = vmul.f32 %v177, 0.5
    %v183 = vtanh.pop %v182
    %v184 = vadd.f32 %v183, 1.0
    %v185 = vmul.f32 %v182, %v184
    %v186 = vpack.c.bf16 %v185, %v185
    %v187 = vld [vmem:[#allocation5] sm:$0xf]
    %v188 = vld [vmem:[#allocation5 + $0x4] sm:$0xf]
    %v189 = vld [vmem:[#allocation5 + $0x8] sm:$0xf]
    %v190 = vld [vmem:[#allocation5 + $0xc] sm:$0xf]
    %v191 = vld [vmem:[#allocation5 + $0x10] sm:$0xf]
    %v192 = vld [vmem:[#allocation5 + $0x14] sm:$0xf]
    %v193 = vld [vmem:[#allocation5 + $0x18] sm:$0xf]
    %v194 = vld [vmem:[#allocation5 + $0x1c] sm:$0xf]
    %v195 = vld [vmem:[#allocation5 + $0x20] sm:$0xf]
    %v196 = vld [vmem:[#allocation5 + $0x24] sm:$0xf]
    %v197 = vld [vmem:[#allocation5 + $0x28] sm:$0xf]
    %v198 = vld [vmem:[#allocation5 + $0x2c] sm:$0xf]
    %v199 = vld [vmem:[#allocation5 + $0x30] sm:$0xf]
    %v200 = vld [vmem:[#allocation5 + $0x34] sm:$0xf]
    %v201 = vld [vmem:[#allocation5 + $0x38] sm:$0xf]
    %v202 = vld [vmem:[#allocation5 + $0x3c] sm:$0xf]
    %v203 = vld [vmem:[%s4] sm:$0x1]
    %v205 = vlaneseq
    %v206 = vshrl.u32 %v205, 7
    %v207 = vsub.s32 0, %v206
    %v208 = vrot.slane %v203, %v207
    %v226 = vunpack.c.l.b16 %v187
    %v227 = vunpack.c.l.b16 %v188
    %v228 = vunpack.c.l.b16 %v189
    %v229 = vunpack.c.l.b16 %v190
    %v230 = vunpack.c.l.b16 %v191
    %v231 = vunpack.c.l.b16 %v192
    %v232 = vunpack.c.l.b16 %v193
    %v233 = vunpack.c.l.b16 %v194
    %v234 = vunpack.c.l.b16 %v195
    %v235 = vunpack.c.l.b16 %v196
    %v236 = vunpack.c.l.b16 %v197
    %v237 = vunpack.c.l.b16 %v198
    %v238 = vunpack.c.l.b16 %v199
    %v239 = vunpack.c.l.b16 %v200
    %v240 = vunpack.c.l.b16 %v201
    %v241 = vunpack.c.l.b16 %v202
    %v242 = vpack.c.b16 %v227, %v226
    %v243 = vpack.c.b16 %v229, %v228
    %v244 = vpack.c.b16 %v231, %v230
    %v245 = vpack.c.b16 %v233, %v232
    %v246 = vpack.c.b16 %v235, %v234
    %v247 = vpack.c.b16 %v237, %v236
    %v248 = vpack.c.b16 %v239, %v238
    %v249 = vpack.c.b16 %v241, %v240
    %258 = vmatprep.subr.bf16.mxu0 0
    %259 = vmatpush1.bf16.msra.mxu0 %v249
    %260 = vmatprep.subr.bf16.mxu0 0
    %261 = vmatpush1.bf16.msra.mxu0 %v248
    %262 = vmatprep.subr.bf16.mxu0 0
    %263 = vmatpush1.bf16.msra.mxu0 %v247
    %264 = vmatprep.subr.bf16.mxu0 0
    %265 = vmatpush1.bf16.msra.mxu0 %v246
    %266 = vmatprep.subr.bf16.mxu0 0
    %267 = vmatpush1.bf16.msra.mxu0 %v245
    %268 = vmatprep.subr.bf16.mxu0 0
    %269 = vmatpush1.bf16.msra.mxu0 %v244
    %270 = vmatprep.subr.bf16.mxu0 0
    %271 = vmatpush1.bf16.msra.mxu0 %v243
    %272 = vmatprep.subr.bf16.mxu0 0
    %273 = vmatpush1.bf16.msra.mxu0 %v242
    %274 = vmatprep.subr.bf16.mxu0 0
    %275 = vmatpush2.bf16.msra.mxu0 0
    %276 = vmatprep.subr.bf16.mxu0 0
    %277 = vmatpush2.bf16.msra.mxu0 0
    %278 = vmatprep.subr.bf16.mxu0 0
    %279 = vmatpush2.bf16.msra.mxu0 0
    %280 = vmatprep.subr.bf16.mxu0 0
    %281 = vmatpush2.bf16.msra.mxu0 0
    %282 = vmatprep.subr.bf16.mxu0 0
    %283 = vmatpush2.bf16.msra.mxu0 0
    %284 = vmatprep.subr.bf16.mxu0 0
    %285 = vmatpush2.bf16.msra.mxu0 0
    %286 = vmatprep.subr.bf16.mxu0 0
    %287 = vmatpush2.bf16.msra.mxu0 0
    %288 = vmatprep.subr.bf16.mxu0 0
    %289 = vmatpush2.bf16.msra.mxu0 0
    %290 = vmatprep.mubr.bf16.mxu0 0
    %291 = vmatmul.mubr.bf16.gmra.mxu0 %v186
    %v292 = vpop.f32.mrf.mxu0
    %v293 = vadd.f32 %v208, %v292
    %v294 = vpop.f32.mrf.mxu0
    %v295 = vpop.f32.mrf.mxu0
    %v296 = vpop.f32.mrf.mxu0
    %297 = vdwg.mxu0
    %v298 = vmul.f32 %v293, 0.5
    %v299 = vtanh.pop %v298
    %v300 = vadd.f32 %v299, 1.0
    %v301 = vmul.f32 %v298, %v300
    %v302 = vpack.c.bf16 %v301, %v301
    %v303 = vld [vmem:[#allocation7] sm:$0xf]
    %v304 = vld [vmem:[#allocation7 + $0x4] sm:$0xf]
    %v305 = vld [vmem:[#allocation7 + $0x8] sm:$0xf]
    %v306 = vld [vmem:[#allocation7 + $0xc] sm:$0xf]
    %v307 = vld [vmem:[#allocation7 + $0x10] sm:$0xf]
    %v308 = vld [vmem:[#allocation7 + $0x14] sm:$0xf]
    %v309 = vld [vmem:[#allocation7 + $0x18] sm:$0xf]
    %v310 = vld [vmem:[#allocation7 + $0x1c] sm:$0xf]
    %v311 = vld [vmem:[#allocation7 + $0x20] sm:$0xf]
    %v312 = vld [vmem:[#allocation7 + $0x24] sm:$0xf]
    %v313 = vld [vmem:[#allocation7 + $0x28] sm:$0xf]
    %v314 = vld [vmem:[#allocation7 + $0x2c] sm:$0xf]
    %v315 = vld [vmem:[#allocation7 + $0x30] sm:$0xf]
    %v316 = vld [vmem:[#allocation7 + $0x34] sm:$0xf]
    %v317 = vld [vmem:[#allocation7 + $0x38] sm:$0xf]
    %v318 = vld [vmem:[#allocation7 + $0x3c] sm:$0xf]
    %v319 = vld [vmem:[#allocation7 + $0x40] sm:$0xf]
    %v320 = vld [vmem:[#allocation7 + $0x44] sm:$0xf]
    %v321 = vld [vmem:[#allocation7 + $0x48] sm:$0xf]
    %v322 = vld [vmem:[#allocation7 + $0x4c] sm:$0xf]
    %v323 = vld [vmem:[#allocation7 + $0x50] sm:$0xf]
    %v324 = vld [vmem:[#allocation7 + $0x54] sm:$0xf]
    %v325 = vld [vmem:[#allocation7 + $0x58] sm:$0xf]
    %v326 = vld [vmem:[#allocation7 + $0x5c] sm:$0xf]
    %v327 = vld [vmem:[#allocation7 + $0x60] sm:$0xf]
    %v328 = vld [vmem:[#allocation7 + $0x64] sm:$0xf]
    %v329 = vld [vmem:[#allocation7 + $0x68] sm:$0xf]
    %v330 = vld [vmem:[#allocation7 + $0x6c] sm:$0xf]
    %v331 = vld [vmem:[#allocation7 + $0x70] sm:$0xf]
    %v332 = vld [vmem:[#allocation7 + $0x74] sm:$0xf]
    %v333 = vld [vmem:[#allocation7 + $0x78] sm:$0xf]
    %v334 = vld [vmem:[#allocation7 + $0x7c] sm:$0xf]
    %v335 = vld [vmem:[%s6] sm:$0x1]
    %v337 = vlaneseq
    %v338 = vshrl.u32 %v337, 7
    %v339 = vsub.s32 0, %v338
    %v340 = vrot.slane %v335, %v339
    %v374 = vunpack.c.l.b16 %v303
    %v375 = vunpack.c.l.b16 %v304
    %v376 = vunpack.c.l.b16 %v305
    %v377 = vunpack.c.l.b16 %v306
    %v378 = vunpack.c.l.b16 %v307
    %v379 = vunpack.c.l.b16 %v308
    %v380 = vunpack.c.l.b16 %v309
    %v381 = vunpack.c.l.b16 %v310
    %v382 = vunpack.c.l.b16 %v311
    %v383 = vunpack.c.l.b16 %v312
    %v384 = vunpack.c.l.b16 %v313
    %v385 = vunpack.c.l.b16 %v314
    %v386 = vunpack.c.l.b16 %v315
    %v387 = vunpack.c.l.b16 %v316
    %v388 = vunpack.c.l.b16 %v317
    %v389 = vunpack.c.l.b16 %v318
    %v390 = vunpack.c.l.b16 %v319
    %v391 = vunpack.c.l.b16 %v320
    %v392 = vunpack.c.l.b16 %v321
    %v393 = vunpack.c.l.b16 %v322
    %v394 = vunpack.c.l.b16 %v323
    %v395 = vunpack.c.l.b16 %v324
    %v396 = vunpack.c.l.b16 %v325
    %v397 = vunpack.c.l.b16 %v326
    %v398 = vunpack.c.l.b16 %v327
    %v399 = vunpack.c.l.b16 %v328
    %v400 = vunpack.c.l.b16 %v329
    %v401 = vunpack.c.l.b16 %v330
    %v402 = vunpack.c.l.b16 %v331
    %v403 = vunpack.c.l.b16 %v332
    %v404 = vunpack.c.l.b16 %v333
    %v405 = vunpack.c.l.b16 %v334
    %v406 = vpack.c.b16 %v375, %v374
    %v407 = vpack.c.b16 %v377, %v376
    %v408 = vpack.c.b16 %v379, %v378
    %v409 = vpack.c.b16 %v381, %v380
    %v410 = vpack.c.b16 %v383, %v382
    %v411 = vpack.c.b16 %v385, %v384
    %v412 = vpack.c.b16 %v387, %v386
    %v413 = vpack.c.b16 %v389, %v388
    %v414 = vpack.c.b16 %v391, %v390
    %v415 = vpack.c.b16 %v393, %v392
    %v416 = vpack.c.b16 %v395, %v394
    %v417 = vpack.c.b16 %v397, %v396
    %v418 = vpack.c.b16 %v399, %v398
    %v419 = vpack.c.b16 %v401, %v400
    %v420 = vpack.c.b16 %v403, %v402
    %v421 = vpack.c.b16 %v405, %v404
    %438 = vmatprep.subr.bf16.mxu0 0
    %439 = vmatpush1.bf16.msra.mxu0 %v413
    %440 = vmatprep.subr.bf16.mxu0 0
    %441 = vmatpush1.bf16.msra.mxu0 %v412
    %442 = vmatprep.subr.bf16.mxu0 0
    %443 = vmatpush1.bf16.msra.mxu0 %v411
    %444 = vmatprep.subr.bf16.mxu0 0
    %445 = vmatpush1.bf16.msra.mxu0 %v410
    %446 = vmatprep.subr.bf16.mxu0 0
    %447 = vmatpush1.bf16.msra.mxu0 %v409
    %448 = vmatprep.subr.bf16.mxu0 0
    %449 = vmatpush1.bf16.msra.mxu0 %v408
    %450 = vmatprep.subr.bf16.mxu0 0
    %451 = vmatpush1.bf16.msra.mxu0 %v407
    %452 = vmatprep.subr.bf16.mxu0 0
    %453 = vmatpush1.bf16.msra.mxu0 %v406
    %454 = vmatprep.subr.bf16.mxu0 0
    %455 = vmatpush2.bf16.msra.mxu0 %v421
    %456 = vmatprep.subr.bf16.mxu0 0
    %457 = vmatpush2.bf16.msra.mxu0 %v420
    %458 = vmatprep.subr.bf16.mxu0 0
    %459 = vmatpush2.bf16.msra.mxu0 %v419
    %460 = vmatprep.subr.bf16.mxu0 0
    %461 = vmatpush2.bf16.msra.mxu0 %v418
    %462 = vmatprep.subr.bf16.mxu0 0
    %463 = vmatpush2.bf16.msra.mxu0 %v417
    %464 = vmatprep.subr.bf16.mxu0 0
    %465 = vmatpush2.bf16.msra.mxu0 %v416
    %466 = vmatprep.subr.bf16.mxu0 0
    %467 = vmatpush2.bf16.msra.mxu0 %v415
    %468 = vmatprep.subr.bf16.mxu0 0
    %469 = vmatpush2.bf16.msra.mxu0 %v414
    %470 = vmatprep.mubr.bf16.mxu0 %v70
    %471 = vmatmul.mubr.bf16.gmra.mxu0 %v302
    %v472 = vpop.f32.mrf.mxu0
    %v473 = vadd.f32 %v340, %v472
    %v474 = vpop.f32.mrf.mxu0
    %v475 = vpop.f32.mrf.mxu0
    %v476 = vpop.f32.mrf.mxu0
    %477 = vdwg.mxu0
    %478 = vst [vmem:[#allocation8] sm:$0xff] %v473
    // Predicated region
    $region42: #{mlp_forward.1} parent=1 // pred_check
      _
    $region43: #{mlp_forward.1} parent=1 // pred_check_branch
      %480 = sbr.rel (0) target = $region45
    $region44: #{mlp_forward.1} parent=1 // pred_region
      %s482 = ssub.s32 128, 128
      %483 = vsyncadd [#allocation4], %s482
      %s485 = sshll.u32 [#allocation8], 4
      %s486 = int_to_ptr.vmem [resolvable:$true] %s485
      %488 = dma.vmem_to_hbm [thread:$0]  %s486, 128, %s7, [#allocation4]
    $region45: #{mlp_forward.1} parent=1 // pred_fallthru
      _
    // Predicated region
    $region46: #{mlp_forward.1} parent=1 // pred_check
      _
    $region47: #{mlp_forward.1} parent=1 // pred_check_branch
      %490 = sbr.rel (0) target = $region49
    $region48: #{mlp_forward.1} parent=1 // pred_region
      %491 = dma.done [#allocation4], 128
    $region49: #{mlp_forward.1} parent=1 // pred_fallthru
      _
    %492 = vsyncpa [#allocation3], 1
    %493 = vsyncpa [#allocation6], 1
    %494 = vsyncpa [#allocation4], 1

</llo_original>
